<compile_context>
chip_gen: v7x
topology: tpu7x:2x2x1
jax: 0.10.0
libtpu: 0.0.40
codegen_flags: <defaults>
</compile_context>

<pallas_src>
import jax
import jax.numpy as jnp
from jax.experimental import pallas as pl
from jax.experimental.pallas import tpu as pltpu


def _round_up(x, mult):
    return (x + mult - 1) // mult * mult


def _packed_linear_relu_kernel(x_ref, w_ref, b_ref, o_ref):
    # x_ref: (TMP, G*K) packed row tile (G=16 original rows per packed row)
    # w_ref: (G*K, G*N) block-diagonal expanded weight, caller dtype
    # b_ref: (1,   G*N) tiled bias, f32
    # o_ref: (TMP, G*N) lane-dense packed output tile (128 lanes)
    y = jnp.dot(x_ref[...], w_ref[...], preferred_element_type=jnp.float32)
    y = y + b_ref[...]
    o_ref[...] = jnp.maximum(y, 0.0).astype(o_ref.dtype)


def model_forward(x1, weight, bias, *, tile_rows_packed=4096):
    """relu(linear(x1)) with PyTorch nn.Linear(5, 8) semantics, dtype-preserving."""
    *lead, k = x1.shape
    n = weight.shape[0]
    out_dtype = x1.dtype

    m = 1
    for d in lead:
        m *= d
    if m == 0:
        return jnp.zeros((*lead, n), dtype=out_dtype)

    group = 128 // n          # 16 original rows per packed row
    lanes = group * n         # 128 (lane-dense output)
    pk = group * k            # 80  (packed input width)

    x2d = x1.reshape(m, k)

    # Pad original rows only when required by the 16-row packing (single copy;
    # padded rows compute garbage/relu(bias) and are sliced away afterwards).
    if m % group != 0:
        m_pad = _round_up(m, 128)     # multiple of group, sublane-aligned packed rows
        x2d = jnp.pad(x2d, ((0, m_pad - m), (0, 0)))
    else:
        m_pad = m

    mp = m_pad // group
    xp = x2d.reshape(mp, pk)          # free contiguous reshape

    # Expanded block-diagonal weight (80,128) and 128-lane tiled bias (tiny).
    w_kn = weight.T.astype(x2d.dtype)
    w_exp = jnp.kron(jnp.eye(group, dtype=w_kn.dtype), w_kn)
    b_tile = jnp.tile(bias.astype(jnp.float32), group).reshape(1, lanes)

    # Tile in packed rows; keep it a multiple of 8 sublanes. Default 4096 packed
    # rows => ~3.4 MB HBM per step (f32), ~6.5 MB double-buffered VMEM.
    tmp = min(tile_rows_packed, _round_up(mp, 8))
    tmp = max(8, _round_up(tmp, 8))
    grid = (pl.cdiv(mp, tmp),)        # ragged last block handled by Pallas

    out_p = pl.pallas_call(
        _packed_linear_relu_kernel,
        out_shape=jax.ShapeDtypeStruct((mp, lanes), out_dtype),
        grid=grid,
        in_specs=[
            pl.BlockSpec((tmp, pk), lambda i: (i, 0)),     # packed row tile
            pl.BlockSpec((pk, lanes), lambda i: (0, 0)),   # expanded weight, resident
            pl.BlockSpec((1, lanes), lambda i: (0, 0)),    # tiled bias, resident
        ],
        out_specs=pl.BlockSpec((tmp, lanes), lambda i: (i, 0)),
        compiler_params=pltpu.CompilerParams(
            dimension_semantics=("parallel",),             # shard row tiles across TCs
        ),
    )(xp, w_exp, b_tile)

    out2d = out_p.reshape(m_pad, n)
    if m_pad != m:
        out2d = out2d[:m]
    return out2d.reshape(*lead, n)


if __name__ == "__main__":
    key = jax.random.PRNGKey(0)
    k_x, k_w, k_b, k_x2, k_x3, k_x4 = jax.random.split(key, 6)

    # nn.Linear(5, 8) parameters, PyTorch-style U(-1/sqrt(fan_in), +1/sqrt(fan_in)).
    bound = 1.0 / jnp.sqrt(5.0)
    weight = jax.random.uniform(k_w, (8, 5), minval=-bound, maxval=bound,
                                dtype=jnp.float32)
    bias = jax.random.uniform(k_b, (8,), minval=-bound, maxval=bound,
                              dtype=jnp.float32)

    def ref_fn(x):
        return jnp.maximum(
            jnp.einsum("...k,nk->...n", x.astype(jnp.float32), weight) + bias, 0.0)

    # 1) Small shape consistent with nn.Linear(5, 8): (batch=2, seq=8, in=5).
    x1 = jax.random.normal(k_x, (2, 8, 5), dtype=jnp.float32)
    out = model_forward(x1, weight, bias)
    jax.block_until_ready(out)
    assert out.shape == (2, 8, 8)
    assert jnp.allclose(out, ref_fn(x1), atol=1e-5, rtol=1e-5)

    # 2) Multi-step grid + ragged last block (m=1200 -> mp=75, tile=32, grid=3).
    x1b = jax.random.normal(k_x2, (3, 400, 5), dtype=jnp.float32)
    outb = model_forward(x1b, weight, bias, tile_rows_packed=32)
    jax.block_until_ready(outb)
    assert outb.shape == (3, 400, 8)
    assert jnp.allclose(outb, ref_fn(x1b), atol=1e-5, rtol=1e-5)

    # 3) Padding path (m=63, not a multiple of the 16-row packing group).
    x1c = jax.random.normal(k_x3, (7, 9, 5), dtype=jnp.float32)
    outc = model_forward(x1c, weight, bias)
    jax.block_until_ready(outc)
    assert outc.shape == (7, 9, 8)
    assert jnp.allclose(outc, ref_fn(x1c), atol=1e-5, rtol=1e-5)

    # 4) Dtype-preserving bf16 path (bf16 in -> bf16 out, f32 accumulation).
    x1d = jax.random.normal(k_x4, (4, 40, 5), dtype=jnp.bfloat16)
    outd = model_forward(x1d, weight, bias)
    jax.block_until_ready(outd)
    assert outd.dtype == jnp.bfloat16 and outd.shape == (4, 40, 8)
    assert jnp.allclose(outd.astype(jnp.float32), ref_fn(x1d), atol=2e-2, rtol=2e-2)

    print("KERNEL_OK")
</pallas_src>

<mosaic_0001>
module attributes {stable_mosaic.version = 11 : i64} {
  func.func @_packed_linear_relu_kernel(%arg0: i32, %arg1: memref<8x80xf32, #tpu.memory_space<vmem>>, %arg2: memref<80x128xf32, #tpu.memory_space<vmem>>, %arg3: memref<1x128xf32, #tpu.memory_space<vmem>>, %arg4: memref<8x128xf32, #tpu.memory_space<vmem>>) attributes {dimension_semantics = [#tpu.dimension_semantics<parallel>], iteration_bounds = array<i64: 1>, scalar_prefetch = 0 : i64, scratch_operands = 0 : i64, tpu.core_type = #tpu.core_type<tc>, window_params = [{transform_indices = @transform_0, window_bounds = array<i64: 8, 80>}, {pipeline_mode = #tpu.pipeline_mode<synchronous>, transform_indices = @transform_1, window_bounds = array<i64: 80, 128>}, {pipeline_mode = #tpu.pipeline_mode<synchronous>, transform_indices = @transform_2, window_bounds = array<i64: 1, 128>}, {transform_indices = @transform_3, window_bounds = array<i64: 8, 128>}]} {
    %c0 = arith.constant 0 : index
    %c0_0 = arith.constant 0 : index
    %0 = vector.load %arg1[%c0, %c0_0] : memref<8x80xf32, #tpu.memory_space<vmem>>, vector<8x80xf32>
    %c0_1 = arith.constant 0 : index
    %c0_2 = arith.constant 0 : index
    %1 = vector.load %arg2[%c0_1, %c0_2] : memref<80x128xf32, #tpu.memory_space<vmem>>, vector<80x128xf32>
    %cst = arith.constant dense<0.000000e+00> : vector<8x128xf32>
    %2 = tpu.matmul %0, %1, %cst {dimension_numbers = #tpu.dot_dimension_numbers<[1], [0], [0], [1], [0, 0, 1, 1], [], []>} : vector<8x80xf32>, vector<80x128xf32>, vector<8x128xf32> -> vector<8x128xf32>
    %c0_3 = arith.constant 0 : index
    %c0_4 = arith.constant 0 : index
    %3 = vector.load %arg3[%c0_3, %c0_4] : memref<1x128xf32, #tpu.memory_space<vmem>>, vector<1x128xf32>
    %4 = vector.broadcast %3 : vector<1x128xf32> to vector<8x128xf32>
    %5 = arith.addf %2, %4 : vector<8x128xf32>
    %cst_5 = arith.constant 0.000000e+00 : f32
    %6 = vector.broadcast %cst_5 : f32 to vector<8x128xf32>
    %7 = arith.maximumf %5, %6 : vector<8x128xf32>
    %c0_6 = arith.constant 0 : index
    %c0_7 = arith.constant 0 : index
    %8 = vector.load %arg4[%c0_6, %c0_7] : memref<8x128xf32, #tpu.memory_space<vmem>>, vector<8x128xf32>
    tpu.vector_store %arg4[%c0_6, %c0_7], %7 {strides = array<i32>} : memref<8x128xf32, #tpu.memory_space<vmem>>, vector<8x128xf32>,
    return
  }
  func.func @transform_0(%arg0: i32) -> (i32, i32) {
    %c0_i32 = arith.constant 0 : i32
    %c0_i32_0 = arith.constant 0 : i32
    return %arg0, %c0_i32 : i32, i32
  }
  func.func @transform_1(%arg0: i32) -> (i32, i32) {
    %c0_i32 = arith.constant 0 : i32
    %c0_i32_0 = arith.constant 0 : i32
    %c0_i32_1 = arith.constant 0 : i32
    return %c0_i32, %c0_i32_0 : i32, i32
  }
  func.func @transform_2(%arg0: i32) -> (i32, i32) {
    %c0_i32 = arith.constant 0 : i32
    %c0_i32_0 = arith.constant 0 : i32
    %c0_i32_1 = arith.constant 0 : i32
    return %c0_i32, %c0_i32_0 : i32, i32
  }
  func.func @transform_3(%arg0: i32) -> (i32, i32) {
    %c0_i32 = arith.constant 0 : i32
    %c0_i32_0 = arith.constant 0 : i32
    return %arg0, %c0_i32 : i32, i32
  }
}

</mosaic_0001>

<llo_original>
// kernel: tpu_custom_call.1
$region0: #{tpu_custom_call.1}
  #allocation0 [shape = 'u32[]', space=smem, size = 0x4, offset = 0x4, fixed_abs, tag = 'smem constant byte address 0x4 - core index']
  #allocation1 [shape = 'u32[144,128]{1,0:T(1,128)}', space=vmem, size = 0x12000, scoped, tag = 'internal scratch']
  %s0 = inlined_call_operand.hbm [shape: f32[1,80], index: 0, kind: input, shape index: {}]
  %s1 = inlined_call_operand.hbm [shape: f32[80,128], index: 1, kind: input, shape index: {}]
  %s2 = inlined_call_operand.vmem [shape: f32[1,128], index: 2, kind: input, shape index: {}]
  %s3 = inlined_call_operand.hbm [shape: f32[1,128], index: 3, kind: output, shape index: {}]
  %s4 = sld [smem:[#allocation0]]
  $region30: #{tpu_custom_call.1} parent=0
    _
  %s6 = ssub.s32 1, %s4
  %s7 = scalar_select 0, %s6, %s4
  $region1: #{tpu_custom_call.1} parent=0
    #allocation2 [shape = 'u8[4096]{0}', space=vmem, size = 0x1000, scoped, tag = 'input window, operand 0, single buffered']
    #allocation3 [shape = 's32[1]{0}', space=sflag, size = 0x4, scoped, tag = 'scoped memory for tpu_custom_call.1']
    #allocation4 [shape = 's32[1]{0}', space=sflag, size = 0x4, scoped, tag = 'scoped memory for tpu_custom_call.1']
    #allocation5 [shape = 'u8[40960]{0}', space=vmem, size = 0xa000, scoped, tag = 'input window, operand 1, single buffered']
    #allocation6 [shape = 's32[1]{0}', space=sflag, size = 0x4, scoped, tag = 'scoped memory for tpu_custom_call.1']
    #allocation7 [shape = 'u8[4096]{0}', space=vmem, size = 0x1000, scoped, tag = 'output window, operand 0, single buffered']
    %8 = vsyncpa [#allocation3], 0
    %9 = vsyncpa [#allocation6], 0
    %10 = vsyncpa [#allocation4], 0
    // Predicated region
    $region2: #{tpu_custom_call.1} parent=1 // pred_check
      _
    $region3: #{tpu_custom_call.1} parent=1 // pred_check_branch
      %12 = sbr.rel (0) target = $region5
    $region4: #{tpu_custom_call.1} parent=1 // pred_region
      %s14 = ssub.s32 128, 16
      %15 = vsyncadd [#allocation3], %s14
      %s16 = sshll.u32 [#allocation2], 4
      %s17 = int_to_ptr.vmem [resolvable:$true] %s16
      %22 = dma.hbm_to_vmem [thread:$0]  %s0, 16, %s17, [#allocation3], 16, 16, 1
    $region5: #{tpu_custom_call.1} parent=1 // pred_fallthru
      _
    // Predicated region
    $region6: #{tpu_custom_call.1} parent=1 // pred_check
      _
    $region7: #{tpu_custom_call.1} parent=1 // pred_check_branch
      %24 = sbr.rel (0) target = $region9
    $region8: #{tpu_custom_call.1} parent=1 // pred_region
      %s26 = ssub.s32 1280, 1280
      %27 = vsyncadd [#allocation6], %s26
      %s28 = sshll.u32 [#allocation5], 4
      %s29 = int_to_ptr.vmem [resolvable:$true] %s28
      %34 = dma.hbm_to_vmem [thread:$0]  %s1, 1280, %s29, [#allocation6], 128, 128, 8
    $region9: #{tpu_custom_call.1} parent=1 // pred_fallthru
      _
    // Predicated region
    $region10: #{tpu_custom_call.1} parent=1 // pred_check
      _
    $region11: #{tpu_custom_call.1} parent=1 // pred_check_branch
      %36 = sbr.rel (0) target = $region13
    $region12: #{tpu_custom_call.1} parent=1 // pred_region
      _
    $region13: #{tpu_custom_call.1} parent=1 // pred_fallthru
      _
    // Predicated region
    $region14: #{tpu_custom_call.1} parent=1 // pred_check
      _
    $region15: #{tpu_custom_call.1} parent=1 // pred_check_branch
      %38 = sbr.rel (0) target = $region17
    $region16: #{tpu_custom_call.1} parent=1 // pred_region
      %39 = dma.done [#allocation3], 128
    $region17: #{tpu_custom_call.1} parent=1 // pred_fallthru
      _
    // Predicated region
    $region18: #{tpu_custom_call.1} parent=1 // pred_check
      _
    $region19: #{tpu_custom_call.1} parent=1 // pred_check_branch
      %41 = sbr.rel (0) target = $region21
    $region20: #{tpu_custom_call.1} parent=1 // pred_region
      %42 = dma.done [#allocation6], 1280
    $region21: #{tpu_custom_call.1} parent=1 // pred_fallthru
      _
    %v43 = vld [vmem:[#allocation2] sm:$0xff]
    %v44 = vld [vmem:[#allocation5] sm:$0xff]
    %v45 = vld [vmem:[#allocation5 + $0x8] sm:$0xff]
    %v46 = vld [vmem:[#allocation5 + $0x10] sm:$0xff]
    %v47 = vld [vmem:[#allocation5 + $0x18] sm:$0xff]
    %v48 = vld [vmem:[#allocation5 + $0x20] sm:$0xff]
    %v49 = vld [vmem:[#allocation5 + $0x28] sm:$0xff]
    %v50 = vld [vmem:[#allocation5 + $0x30] sm:$0xff]
    %v51 = vld [vmem:[#allocation5 + $0x38] sm:$0xff]
    %v52 = vld [vmem:[#allocation5 + $0x40] sm:$0xff]
    %v53 = vld [vmem:[#allocation5 + $0x48] sm:$0xff]
    %v54 = vld [vmem:[%s2] sm:$0x1]
    %v56 = vlaneseq
    %v57 = vshrl.u32 %v56, 7
    %v58 = vsub.s32 0, %v57
    %v59 = vrot.slane %v54, %v58
    %vm61 = vcmask 654336
    %v63 = vsel %vm61, %v43, 0
    %65 = vmatprep.subr.mxu0 0.0
    %66 = vmatpush1.msra.mxu0 %v44
    %67 = vmatprep.subr.mxu0 0.0
    %68 = vmatpush1.msra.mxu0 %v45
    %69 = vmatprep.subr.mxu0 0.0
    %70 = vmatpush1.msra.mxu0 %v46
    %71 = vmatprep.subr.mxu0 0.0
    %72 = vmatpush1.msra.mxu0 %v47
    %73 = vmatprep.subr.mxu0 0.0
    %74 = vmatpush1.msra.mxu0 %v48
    %75 = vmatprep.subr.mxu0 0.0
    %76 = vmatpush1.msra.mxu0 %v49
    %77 = vmatprep.subr.mxu0 0.0
    %78 = vmatpush1.msra.mxu0 %v50
    %79 = vmatprep.subr.mxu0 0.0
    %80 = vmatpush1.msra.mxu0 %v51
    %81 = vmatprep.subr.mxu0 0.0
    %82 = vmatpush1.msra.mxu0 %v52
    %83 = vmatprep.subr.mxu0 0.0
    %84 = vmatpush1.msra.mxu0 %v53
    %85 = vmatprep.subr.mxu0 0.0
    %86 = vmatpush1.msra.mxu0 0.0
    %87 = vmatprep.subr.mxu0 0.0
    %88 = vmatpush1.msra.mxu0 0.0
    %89 = vmatprep.subr.mxu0 0.0
    %90 = vmatpush1.msra.mxu0 0.0
    %91 = vmatprep.subr.mxu0 0.0
    %92 = vmatpush1.msra.mxu0 0.0
    %93 = vmatprep.subr.mxu0 0.0
    %94 = vmatpush1.msra.mxu0 0.0
    %95 = vmatprep.subr.mxu0 0.0
    %96 = vmatpush1.msra.mxu0 0.0
    %97 = vmatprep.subr.mxu0 0.0
    %98 = vmatpush1.msra.mxu0 0.0
    %99 = vmatprep.subr.mxu0 0.0
    %100 = vmatpush1.msra.mxu0 0.0
    %101 = vmatprep.subr.mxu0 0.0
    %102 = vmatpush1.msra.mxu0 0.0
    %103 = vmatprep.subr.mxu0 0.0
    %104 = vmatpush1.msra.mxu0 0.0
    %105 = vmatprep.subr.mxu0 0.0
    %106 = vmatpush1.msra.mxu0 0.0
    %107 = vmatprep.subr.mxu0 0.0
    %108 = vmatpush1.msra.mxu0 0.0
    %109 = vmatprep.subr.mxu0 0.0
    %110 = vmatpush1.msra.mxu0 0.0
    %111 = vmatprep.subr.mxu0 0.0
    %112 = vmatpush1.msra.mxu0 0.0
    %113 = vmatprep.subr.mxu0 0.0
    %114 = vmatpush1.msra.mxu0 0.0
    %115 = vmatprep.subr.mxu0 0.0
    %116 = vmatpush1.msra.mxu0 0.0
    %117 = vmatprep.subr.mxu0 0.0
    %118 = vmatpush1.msra.mxu0 0.0
    %119 = vmatprep.subr.mxu0 0.0
    %120 = vmatpush1.msra.mxu0 0.0
    %121 = vmatprep.subr.mxu0 0.0
    %122 = vmatpush1.msra.mxu0 0.0
    %123 = vmatprep.subr.mxu0 0.0
    %124 = vmatpush1.msra.mxu0 0.0
    %125 = vmatprep.subr.mxu0 0.0
    %126 = vmatpush1.msra.mxu0 0.0
    %127 = vmatprep.subr.mxu0 0.0
    %128 = vmatpush1.msra.mxu0 0.0
    %129 = vmatprep.mubr.f32.mxu0 0.0
    %130 = vmatmul.mubr.f32.gmra.mrb[0].mxu0 %v63
    %v131 = vpop.f32.mrb[0].mxu0
    %v132 = vadd.f32 %v59, %v131
    %v133 = vpop.f32.mrb[0].mxu0
    %134 = vdwg.mxu0
    %v135 = vmax.f32 %v132, 0.0
    %136 = vst [vmem:[#allocation7] sm:$0xff] %v135
    // Predicated region
    $region22: #{tpu_custom_call.1} parent=1 // pred_check
      _
    $region23: #{tpu_custom_call.1} parent=1 // pred_check_branch
      %138 = sbr.rel (0) target = $region25
    $region24: #{tpu_custom_call.1} parent=1 // pred_region
      %s140 = ssub.s32 128, 16
      %141 = vsyncadd [#allocation4], %s140
      %s142 = sshll.u32 [#allocation7], 4
      %s143 = int_to_ptr.vmem [resolvable:$true] %s142
      %148 = dma.vmem_to_hbm [thread:$0]  %s143, 16, %s3, [#allocation4], 16, 16, 1
    $region25: #{tpu_custom_call.1} parent=1 // pred_fallthru
      _
    // Predicated region
    $region26: #{tpu_custom_call.1} parent=1 // pred_check
      _
    $region27: #{tpu_custom_call.1} parent=1 // pred_check_branch
      %150 = sbr.rel (0) target = $region29
    $region28: #{tpu_custom_call.1} parent=1 // pred_region
      %151 = dma.done [#allocation4], 128
    $region29: #{tpu_custom_call.1} parent=1 // pred_fallthru
      _
    %152 = vsyncpa [#allocation3], 1
    %153 = vsyncpa [#allocation6], 1
    %154 = vsyncpa [#allocation4], 1

</llo_original>
